<compile_context>
chip_gen: v7x
topology: tpu7x:2x2x1
jax: 0.10.0
libtpu: 0.0.40
codegen_flags: <defaults>
</compile_context>

<pallas_src>
import jax
import jax.numpy as jnp
from jax.experimental import pallas as pl
from jax.experimental.pallas import tpu as pltpu

MARGIN = 1.0
_NORM_EPS = 1e-12   # torch.nn.functional.normalize default eps
_PDIST_EPS = 1e-6   # torch.nn.functional.pairwise_distance default eps

_LANE = 128
_SUBLANE = 8
_OUT_BLOCK = (_SUBLANE, _LANE)           # lane-dense per-tile output block
_OUT_BLOCK_ELEMS = _SUBLANE * _LANE      # 1024

# Total VMEM spent on the double-buffered input pipeline (both embedding tiles
# + label tile, x2 buffers).  ~24 MiB -> ~6 MiB useful per embedding tile for
# D >= 128, leaving headroom under a 32 MiB scoped-VMEM limit.
_PIPELINE_BUDGET_BYTES = 24 * 1024 * 1024


def _round_up(x, m):
    return ((x + m - 1) // m) * m


def _row_bytes(D):
    """VMEM bytes per batch row for ONE pipeline buffer set.

    Each (TB, D) f32 embedding block lane-pads to max(D, 128) lanes; the
    (TB, 1) f32 label block lane-pads to a full 128-lane row (512 B/row,
    128x its raw size) -- both must be budgeted."""
    emb = 2 * max(D, _LANE) * 4          # two embedding inputs
    lab = _LANE * 4                      # lane-inflated label block
    return emb + lab


def _pick_tb(B, D):
    """Batch-tile size: multiple of 8, sized by a bytes-based VMEM budget
    (accounting for lane padding and double-buffering), and capped so the grid
    has >= 2 steps whenever B > 8 (keeps the second v7x TensorCore busy)."""
    per_row_double_buffered = 2 * _row_bytes(D)
    tb = _PIPELINE_BUDGET_BYTES // per_row_double_buffered
    tb = max(_SUBLANE, (tb // _SUBLANE) * _SUBLANE)

    b_pad = _round_up(B, _SUBLANE)
    tb = min(tb, b_pad)

    if B > _SUBLANE:
        # Force G >= 2 so dimension_semantics=("parallel",) can shard the grid
        # across both v7x TensorCores; harmless (~0.35 us) on v5e/v6e.
        tb = min(tb, _round_up(pl.cdiv(B, 2), _SUBLANE))
    return int(max(tb, _SUBLANE))


def _make_kernel(B, TB):
    eps_sq = _NORM_EPS * _NORM_EPS
    has_tail = (B % TB) != 0

    def kernel(o1_ref, o2_ref, lab_ref, out_ref):
        o1 = o1_ref[...]            # (TB, D) f32
        o2 = o2_ref[...]            # (TB, D) f32
        lab = lab_ref[...]          # (TB, 1) f32

        # Per-row inverse L2 norms via rsqrt (EUP slot) + broadcast multiply,
        # equivalent to x / max(||x||, eps) since max(sqrt(s), eps) ==
        # sqrt(max(s, eps^2)) for s >= 0.
        inv1 = jax.lax.rsqrt(
            jnp.maximum(jnp.sum(o1 * o1, axis=1, keepdims=True), eps_sq))
        inv2 = jax.lax.rsqrt(
            jnp.maximum(jnp.sum(o2 * o2, axis=1, keepdims=True), eps_sq))

        # pairwise_distance: ||x1 - x2 + eps||_2 over dim=1.
        diff = o1 * inv1 - o2 * inv2 + _PDIST_EPS
        d2 = jnp.sum(diff * diff, axis=1, keepdims=True)      # (TB, 1)
        d = jnp.sqrt(d2)                                        # only for the margin branch

        loss = (1.0 - lab) * d2 + lab * jnp.square(jnp.maximum(MARGIN - d, 0.0))

        if has_tail:
            # Mask padded rows of the tail tile BEFORE the reduction so
            # garbage/NaN rows are discarded by the select.
            rows = jax.lax.broadcasted_iota(jnp.int32, (TB, 1), 0)
            remaining = B - pl.program_id(0) * TB
            loss = jnp.where(rows < remaining, loss, 0.0)

        partial = jnp.sum(loss)
        # One splat + unmasked vst: broadcast the tile's partial sum across the
        # whole lane-dense (8, 128) output block.  The wrapper reads a single
        # element per tile, so the final sum stays exact.
        out_ref[...] = jnp.full(_OUT_BLOCK, partial, dtype=jnp.float32)

    return kernel


def contrastive_loss(output1, output2, label, *, tb=None):
    """output1, output2: (B, D) float32; label: (B, 1) float32. Returns scalar f32."""
    B, D = output1.shape
    TB = int(tb) if tb is not None else _pick_tb(B, D)
    G = pl.cdiv(B, TB)

    # Double-buffered pipeline footprint (inputs + label + output blocks);
    # used to pick an explicit scoped-VMEM limit with headroom.
    footprint = 2 * TB * _row_bytes(D) + 2 * _OUT_BLOCK_ELEMS * 4
    vmem_limit = int(min(max(footprint + (8 << 20), 32 << 20), 48 << 20))

    partials = pl.pallas_call(
        _make_kernel(B, TB),
        out_shape=jax.ShapeDtypeStruct((G * _SUBLANE, _LANE), jnp.float32),
        grid_spec=pltpu.PrefetchScalarGridSpec(
            num_scalar_prefetch=0,
            grid=(G,),
            in_specs=[
                pl.BlockSpec((TB, D), lambda i: (i, 0)),
                pl.BlockSpec((TB, D), lambda i: (i, 0)),
                pl.BlockSpec((TB, 1), lambda i: (i, 0)),
            ],
            out_specs=pl.BlockSpec(_OUT_BLOCK, lambda i: (i, 0)),
        ),
        compiler_params=pltpu.CompilerParams(
            dimension_semantics=("parallel",),
            vmem_limit_bytes=vmem_limit),
    )(output1, output2, label)

    # Each (8, 128) block holds 1024 identical copies of that tile's partial
    # sum; take one copy per tile for an exact total, then the mean.
    per_tile = partials.reshape(G, _OUT_BLOCK_ELEMS)[:, 0]
    return jnp.sum(per_tile) / B


def _reference_loss(o1, o2, lab):
    """Torch-faithful reference in plain JAX."""
    n1 = jnp.sqrt(jnp.sum(o1 * o1, axis=1, keepdims=True))
    n2 = jnp.sqrt(jnp.sum(o2 * o2, axis=1, keepdims=True))
    o1n = o1 / jnp.maximum(n1, _NORM_EPS)
    o2n = o2 / jnp.maximum(n2, _NORM_EPS)
    diff = o1n - o2n + _PDIST_EPS
    d = jnp.sqrt(jnp.sum(diff * diff, axis=1, keepdims=True))
    loss = (1.0 - lab) * d * d + lab * jnp.square(jnp.maximum(MARGIN - d, 0.0))
    return jnp.mean(loss)


if __name__ == "__main__":
    key = jax.random.PRNGKey(0)
    k1, k2, k3, k4, k5, k6, k7, k8, k9 = jax.random.split(key, 9)

    # Case 1: regular shapes, auto tile size -> G=2 (no tail), default path.
    B1, D1 = 16, 64
    a1 = jax.random.normal(k1, (B1, D1), dtype=jnp.float32)
    b1 = jax.random.normal(k2, (B1, D1), dtype=jnp.float32)
    l1 = jax.random.bernoulli(k3, 0.5, (B1, 1)).astype(jnp.float32)
    loss1 = contrastive_loss(a1, b1, l1)
    jax.block_until_ready(loss1)
    ref1 = _reference_loss(a1, b1, l1)
    assert jnp.allclose(loss1, ref1, rtol=1e-5, atol=1e-6), (loss1, ref1)

    # Case 2: ragged batch with a forced small tile -> multi-tile grid + tail
    # masking + per-tile partial sums under "parallel" semantics.
    B2, D2 = 12, 32
    a2 = jax.random.normal(k4, (B2, D2), dtype=jnp.float32)
    b2 = jax.random.normal(k5, (B2, D2), dtype=jnp.float32)
    l2 = jax.random.bernoulli(k6, 0.5, (B2, 1)).astype(jnp.float32)
    loss2 = contrastive_loss(a2, b2, l2, tb=8)
    jax.block_until_ready(loss2)
    ref2 = _reference_loss(a2, b2, l2)
    assert jnp.allclose(loss2, ref2, rtol=1e-5, atol=1e-6), (loss2, ref2)

    # Case 3: D=128 (lane-dense), auto tile size -> G=2 with a tail tile.
    B3, D3 = 40, 128
    a3 = jax.random.normal(k7, (B3, D3), dtype=jnp.float32)
    b3 = jax.random.normal(k8, (B3, D3), dtype=jnp.float32)
    l3 = jax.random.bernoulli(k9, 0.5, (B3, 1)).astype(jnp.float32)
    loss3 = contrastive_loss(a3, b3, l3)
    jax.block_until_ready(loss3)
    ref3 = _reference_loss(a3, b3, l3)
    assert jnp.allclose(loss3, ref3, rtol=1e-5, atol=1e-6), (loss3, ref3)

    print("KERNEL_OK")
</pallas_src>

<mosaic_0001>
module attributes {stable_mosaic.version = 11 : i64} {
  func.func @kernel(%arg0: i32, %arg1: memref<8x64xf32, #tpu.memory_space<vmem>>, %arg2: memref<8x64xf32, #tpu.memory_space<vmem>>, %arg3: memref<8x1xf32, #tpu.memory_space<vmem>>, %arg4: memref<8x128xf32, #tpu.memory_space<vmem>>) attributes {dimension_semantics = [#tpu.dimension_semantics<parallel>], iteration_bounds = array<i64: 2>, scalar_prefetch = 0 : i64, scratch_operands = 0 : i64, tpu.core_type = #tpu.core_type<tc>, window_params = [{transform_indices = @transform_0, window_bounds = array<i64: 8, 64>}, {transform_indices = @transform_1, window_bounds = array<i64: 8, 64>}, {transform_indices = @transform_2, window_bounds = array<i64: 8, 1>}, {transform_indices = @transform_3, window_bounds = array<i64: 8, 128>}]} {
    %c0 = arith.constant 0 : index
    %c0_0 = arith.constant 0 : index
    %0 = vector.load %arg1[%c0, %c0_0] : memref<8x64xf32, #tpu.memory_space<vmem>>, vector<8x64xf32>
    %c0_1 = arith.constant 0 : index
    %c0_2 = arith.constant 0 : index
    %1 = vector.load %arg2[%c0_1, %c0_2] : memref<8x64xf32, #tpu.memory_space<vmem>>, vector<8x64xf32>
    %c0_3 = arith.constant 0 : index
    %c0_4 = arith.constant 0 : index
    %2 = vector.load %arg3[%c0_3, %c0_4] : memref<8x1xf32, #tpu.memory_space<vmem>>, vector<8x1xf32>
    %3 = arith.mulf %0, %0 : vector<8x64xf32>
    %cst = arith.constant dense<0.000000e+00> : vector<8xf32>
    %4 = vector.multi_reduction <add>, %3, %cst [1] : vector<8x64xf32> to vector<8xf32>
    %5 = vector.shape_cast %4 : vector<8xf32> to vector<8x1xf32>
    %cst_5 = arith.constant 1.000000e-24 : f32
    %6 = vector.broadcast %cst_5 : f32 to vector<8x1xf32>
    %7 = arith.maximumf %5, %6 : vector<8x1xf32>
    %8 = math.rsqrt %7 : vector<8x1xf32>
    %9 = arith.mulf %1, %1 : vector<8x64xf32>
    %cst_6 = arith.constant dense<0.000000e+00> : vector<8xf32>
    %10 = vector.multi_reduction <add>, %9, %cst_6 [1] : vector<8x64xf32> to vector<8xf32>
    %11 = vector.shape_cast %10 : vector<8xf32> to vector<8x1xf32>
    %cst_7 = arith.constant 1.000000e-24 : f32
    %12 = vector.broadcast %cst_7 : f32 to vector<8x1xf32>
    %13 = arith.maximumf %11, %12 : vector<8x1xf32>
    %14 = math.rsqrt %13 : vector<8x1xf32>
    %15 = vector.broadcast %8 : vector<8x1xf32> to vector<8x64xf32>
    %16 = arith.mulf %0, %15 : vector<8x64xf32>
    %17 = vector.broadcast %14 : vector<8x1xf32> to vector<8x64xf32>
    %18 = arith.mulf %1, %17 : vector<8x64xf32>
    %19 = arith.subf %16, %18 : vector<8x64xf32>
    %cst_8 = arith.constant 9.99999997E-7 : f32
    %20 = vector.broadcast %cst_8 : f32 to vector<8x64xf32>
    %21 = arith.addf %19, %20 : vector<8x64xf32>
    %22 = arith.mulf %21, %21 : vector<8x64xf32>
    %cst_9 = arith.constant dense<0.000000e+00> : vector<8xf32>
    %23 = vector.multi_reduction <add>, %22, %cst_9 [1] : vector<8x64xf32> to vector<8xf32>
    %24 = vector.shape_cast %23 : vector<8xf32> to vector<8x1xf32>
    %25 = math.sqrt %24 : vector<8x1xf32>
    %cst_10 = arith.constant 1.000000e+00 : f32
    %26 = vector.broadcast %cst_10 : f32 to vector<8x1xf32>
    %27 = arith.subf %26, %2 : vector<8x1xf32>
    %28 = arith.mulf %27, %24 : vector<8x1xf32>
    %cst_11 = arith.constant 1.000000e+00 : f32
    %29 = vector.broadcast %cst_11 : f32 to vector<8x1xf32>
    %30 = arith.subf %29, %25 : vector<8x1xf32>
    %cst_12 = arith.constant 0.000000e+00 : f32
    %31 = vector.broadcast %cst_12 : f32 to vector<8x1xf32>
    %32 = arith.maximumf %30, %31 : vector<8x1xf32>
    %33 = arith.mulf %32, %32 : vector<8x1xf32>
    %34 = arith.mulf %2, %33 : vector<8x1xf32>
    %35 = arith.addf %28, %34 : vector<8x1xf32>
    %36 = vector.shape_cast %35 : vector<8x1xf32> to vector<1x8x1xf32>
    %cst_13 = arith.constant dense<0.000000e+00> : vector<1xf32>
    %37 = vector.multi_reduction <add>, %36, %cst_13 [1, 2] : vector<1x8x1xf32> to vector<1xf32>
    %38 = vector.shape_cast %37 : vector<1xf32> to vector<1x1x1xf32>
    %39 = vector.extract %38[0, 0, 0] : f32 from vector<1x1x1xf32>
    %40 = vector.broadcast %39 : f32 to vector<8x128xf32>
    %c0_14 = arith.constant 0 : index
    %c0_15 = arith.constant 0 : index
    %41 = vector.load %arg4[%c0_14, %c0_15] : memref<8x128xf32, #tpu.memory_space<vmem>>, vector<8x128xf32>
    tpu.vector_store %arg4[%c0_14, %c0_15], %40 {strides = array<i32>} : memref<8x128xf32, #tpu.memory_space<vmem>>, vector<8x128xf32>,
    return
  }
  func.func @transform_0(%arg0: i32) -> (i32, i32) {
    %c0_i32 = arith.constant 0 : i32
    %c0_i32_0 = arith.constant 0 : i32
    return %arg0, %c0_i32 : i32, i32
  }
  func.func @transform_1(%arg0: i32) -> (i32, i32) {
    %c0_i32 = arith.constant 0 : i32
    %c0_i32_0 = arith.constant 0 : i32
    return %arg0, %c0_i32 : i32, i32
  }
  func.func @transform_2(%arg0: i32) -> (i32, i32) {
    %c0_i32 = arith.constant 0 : i32
    %c0_i32_0 = arith.constant 0 : i32
    return %arg0, %c0_i32 : i32, i32
  }
  func.func @transform_3(%arg0: i32) -> (i32, i32) {
    %c0_i32 = arith.constant 0 : i32
    %c0_i32_0 = arith.constant 0 : i32
    return %arg0, %c0_i32 : i32, i32
  }
}

</mosaic_0001>

<llo_original>
// kernel: tpu_custom_call.1
$region0: #{tpu_custom_call.1}
  #allocation0 [shape = 'u32[]', space=smem, size = 0x4, offset = 0x4, fixed_abs, tag = 'smem constant byte address 0x4 - core index']
  #allocation1 [shape = 'u32[144,128]{1,0:T(1,128)}', space=vmem, size = 0x12000, scoped, tag = 'internal scratch']
  %s0 = inlined_call_operand.vmem [shape: f32[16,64], index: 0, kind: input, shape index: {}]
  %s1 = inlined_call_operand.hbm [shape: f32[16,64], index: 1, kind: input, shape index: {}]
  %s2 = inlined_call_operand.vmem [shape: f32[16,1], index: 2, kind: input, shape index: {}]
  %s3 = inlined_call_operand.hbm [shape: f32[16,128], index: 3, kind: output, shape index: {}]
  %s4 = sld [smem:[#allocation0]]
  $region49: #{tpu_custom_call.1} parent=0
    _
  %s6 = ssub.s32 1, %s4
  %s7 = scalar_select 0, %s6, %s4
  $region1: #{tpu_custom_call.1} parent=0
    #allocation2 [shape = 'u8[8192]{0}', space=vmem, size = 0x2000, scoped, tag = 'input window, operand 1']
    #allocation3 [shape = 's32[2]{0}', space=sflag, size = 0x8, scoped, tag = 'scoped memory for tpu_custom_call.1']
    #allocation4 [shape = 's32[2]{0}', space=sflag, size = 0x8, scoped, tag = 'scoped memory for tpu_custom_call.1']
    #allocation5 [shape = 'u8[8192]{0}', space=vmem, size = 0x2000, scoped, tag = 'output window, operand 0']
    %8 = vsyncpa [#allocation3], 0
    %s9 = scalar_lea.sflag [#allocation3], 1
    %10 = vsyncpa %s9, 0
    %11 = vsyncpa [#allocation4], 0
    %s12 = scalar_lea.sflag [#allocation4], 1
    %13 = vsyncpa %s12, 0
    loop: start=0, step=1, limit=4
    $region2: #{tpu_custom_call.1} parent=1 // loop_pre_header
      _
    $region3: #{tpu_custom_call.1} parent=1 // loop_header
      %s15 = sphi 0, %s19
      %p16 = scmp.ge.s32.totalorder %s15, 4
      %s25 = sphi 0, %s27
      %s28 = sphi 0, %s25
      %s29 = sphi 0, %s28
      %s45 = sphi 0, %s29
      %s51 = sphi 0, %s53
      %s54 = sphi 0, %s51
      %s55 = sphi 0, %s54
      %s71 = sphi 0, %s55
      %s77 = sphi 0, %s79
      %s80 = sphi 0, %s77
      %s81 = sphi 0, %s80
      %s97 = sphi 0, %s81
      %s103 = sphi 0, %s105
      %s106 = sphi 0, %s103
      %s107 = sphi 0, %s106
      %s123 = sphi 0, %s107
    $region4: #{tpu_custom_call.1} parent=1 // loop_header_branch
      %18 = sbr.rel (%p16) target = $region8
    $region5: #{tpu_custom_call.1} parent=1 // loop_body
      %s20 = ssub.s32 %s15, 1
      %s21 = ssub.s32 %s15, 2
      %s22 = sadd.s32 %s15, 1
      %s23 = ssub.s32 %s15, %s22
      %p24 = scmp.eq.s32.totalorder %s23, 0
      %s26 = sadd.s32 %s25, 1
      %s27 = scalar_select %p24, %s25, %s26
      %p30 = pneg %p24
      %p31 = scmp.eq.s32.totalorder %s15, 1
      %p32 = por %p30, %p31
      %p33 = scmp.ne.s32.totalorder %s25, %s28
      %p34 = scmp.eq.s32.totalorder %s15, 0
      %p35 = por %p33, %p34
      %p36 = scmp.ne.s32.totalorder %s25, %s28
      %p37 = scmp.eq.s32.totalorder %s20, 1
      %p38 = por %p36, %p37
      %p39 = scmp.ne.s32.totalorder %s28, %s29
      %p40 = scmp.eq.s32.totalorder %s20, 0
      %p41 = por %p39, %p40
      %p42 = scmp.ne.s32.totalorder %s28, %s29
      %p43 = scmp.eq.s32.totalorder %s21, 1
      %p44 = por %p42, %p43
      %p46 = scmp.ne.s32.totalorder %s29, %s45
      %p47 = scmp.eq.s32.totalorder %s21, 0
      %p48 = por %p46, %p47
      %s49 = ssub.s32 %s15, %s22
      %p50 = scmp.eq.s32.totalorder %s49, 0
      %s52 = sadd.s32 %s51, 1
      %s53 = scalar_select %p50, %s51, %s52
      %p56 = pneg %p50
      %p57 = scmp.eq.s32.totalorder %s15, 1
      %p58 = por %p56, %p57
      %p59 = scmp.ne.s32.totalorder %s51, %s54
      %p60 = scmp.eq.s32.totalorder %s15, 0
      %p61 = por %p59, %p60
      %p62 = scmp.ne.s32.totalorder %s51, %s54
      %p63 = scmp.eq.s32.totalorder %s20, 1
      %p64 = por %p62, %p63
      %p65 = scmp.ne.s32.totalorder %s54, %s55
      %p66 = scmp.eq.s32.totalorder %s20, 0
      %p67 = por %p65, %p66
      %p68 = scmp.ne.s32.totalorder %s54, %s55
      %p69 = scmp.eq.s32.totalorder %s21, 1
      %p70 = por %p68, %p69
      %p72 = scmp.ne.s32.totalorder %s55, %s71
      %p73 = scmp.eq.s32.totalorder %s21, 0
      %p74 = por %p72, %p73
      %s75 = ssub.s32 %s15, %s22
      %p76 = scmp.eq.s32.totalorder %s75, 0
      %s78 = sadd.s32 %s77, 1
      %s79 = scalar_select %p76, %s77, %s78
      %p82 = pneg %p76
      %p83 = scmp.eq.s32.totalorder %s15, 1
      %p84 = por %p82, %p83
      %p85 = scmp.ne.s32.totalorder %s77, %s80
      %p86 = scmp.eq.s32.totalorder %s15, 0
      %p87 = por %p85, %p86
      %p88 = scmp.ne.s32.totalorder %s77, %s80
      %p89 = scmp.eq.s32.totalorder %s20, 1
      %p90 = por %p88, %p89
      %p91 = scmp.ne.s32.totalorder %s80, %s81
      %p92 = scmp.eq.s32.totalorder %s20, 0
      %p93 = por %p91, %p92
      %p94 = scmp.ne.s32.totalorder %s80, %s81
      %p95 = scmp.eq.s32.totalorder %s21, 1
      %p96 = por %p94, %p95
      %p98 = scmp.ne.s32.totalorder %s81, %s97
      %p99 = scmp.eq.s32.totalorder %s21, 0
      %p100 = por %p98, %p99
      %s101 = ssub.s32 %s15, %s22
      %p102 = scmp.eq.s32.totalorder %s101, 0
      %s104 = sadd.s32 %s103, 1
      %s105 = scalar_select %p102, %s103, %s104
      %p108 = pneg %p102
      %p109 = scmp.eq.s32.totalorder %s15, 1
      %p110 = por %p108, %p109
      %p111 = scmp.ne.s32.totalorder %s103, %s106
      %p112 = scmp.eq.s32.totalorder %s15, 0
      %p113 = por %p111, %p112
      %p114 = scmp.ne.s32.totalorder %s103, %s106
      %p115 = scmp.eq.s32.totalorder %s20, 1
      %p116 = por %p114, %p115
      %p117 = scmp.ne.s32.totalorder %s106, %s107
      %p118 = scmp.eq.s32.totalorder %s20, 0
      %p119 = por %p117, %p118
      %p120 = scmp.ne.s32.totalorder %s106, %s107
      %p121 = scmp.eq.s32.totalorder %s21, 1
      %p122 = por %p120, %p121
      %p124 = scmp.ne.s32.totalorder %s107, %s123
      %p125 = scmp.eq.s32.totalorder %s21, 0
      %p126 = por %p124, %p125
      %p127 = scmp.le.s32.totalorder 1, %s15
      %p128 = scmp.lt.s32.totalorder %s15, 3
      %p129 = pnand %p127, %p128
      %p130 = pneg %p129
      // Predicated region
      $region9: #{tpu_custom_call.1} parent=5 // pred_check
        _
      $region10: #{tpu_custom_call.1} parent=5 // pred_check_branch
        %132 = sbr.rel (%p129) target = $region12
      $region11: #{tpu_custom_call.1} parent=5 // pred_region
        %s133 = ssub.s32 %s15, 1
      $region12: #{tpu_custom_call.1} parent=5 // pred_fallthru
        _
      %p134 = scmp.lt.s32.totalorder %s15, 2
      // Predicated region
      $region13: #{tpu_custom_call.1} parent=5 // pred_check
        %p135 = pneg %p134
      $region14: #{tpu_custom_call.1} parent=5 // pred_check_branch
        %137 = sbr.rel (%p135) target = $region16
      $region15: #{tpu_custom_call.1} parent=5 // pred_region
        // Predicated region
        $region17: #{tpu_custom_call.1} parent=15 // pred_check
          %p138 = pneg %p35
        $region18: #{tpu_custom_call.1} parent=15 // pred_check_branch
          %140 = sbr.rel (%p138) target = $region20
        $region19: #{tpu_custom_call.1} parent=15 // pred_region
          %p141 = scmp.lt.s32.totalorder %s15, 1
          %s142 = scalar_select %p141, %s15, 1
          %s143 = smul.addr %s142, 8
          %s144 = scalar_lea.vmem %s0, %s143
        $region20: #{tpu_custom_call.1} parent=15 // pred_fallthru
          _
        // Predicated region
        $region21: #{tpu_custom_call.1} parent=15 // pred_check
          %p145 = pneg %p61
        $region22: #{tpu_custom_call.1} parent=15 // pred_check_branch
          %147 = sbr.rel (%p145) target = $region24
        $region23: #{tpu_custom_call.1} parent=15 // pred_region
          %s148 = sand.u32 %s51, 1
          %s149 = scalar_lea.sflag [#allocation3], %s148
          %s150 = sand.u32 %s51, 1
          %s151 = smul.addr %s150, 8
          %s152 = scalar_lea.vmem [#allocation2], %s151
          %s154 = ssub.s32 128, 128
          %155 = vsyncadd %s149, %s154
          %s156 = smul.addr %s15, 128
          %s157 = scalar_lea.hbm %s1, %s156
          %s159 = sshll.u32 %s152, 4
          %s160 = int_to_ptr.vmem [resolvable:$true] %s159
          %162 = dma.hbm_to_vmem [thread:$0]  %s157, 128, %s160, %s149
        $region24: #{tpu_custom_call.1} parent=15 // pred_fallthru
          _
        // Predicated region
        $region25: #{tpu_custom_call.1} parent=15 // pred_check
          %p163 = pneg %p87
        $region26: #{tpu_custom_call.1} parent=15 // pred_check_branch
          %165 = sbr.rel (%p163) target = $region28
        $region27: #{tpu_custom_call.1} parent=15 // pred_region
          %p166 = scmp.lt.s32.totalorder %s15, 1
          %s167 = scalar_select %p166, %s15, 1
          %s168 = smul.addr %s167, 8
          %s169 = scalar_lea.vmem %s2, %s168
        $region28: #{tpu_custom_call.1} parent=15 // pred_fallthru
          _
      $region16: #{tpu_custom_call.1} parent=5 // pred_fallthru
        _
      %p170 = scmp.le.s32.totalorder 1, %s15
      %p171 = scmp.lt.s32.totalorder %s15, 3
      %p172 = pnand %p170, %p171
      %p173 = pneg %p172
      // Predicated region
      $region29: #{tpu_custom_call.1} parent=5 // pred_check
        _
      $region30: #{tpu_custom_call.1} parent=5 // pred_check_branch
        %175 = sbr.rel (%p172) target = $region32
      $region31: #{tpu_custom_call.1} parent=5 // pred_region
        %s176 = ssub.s32 %s15, 1
        %s177 = sand.u32 %s54, 1
        %s178 = scalar_lea.sflag [#allocation3], %s177
        %s179 = sand.u32 %s54, 1
        %s180 = smul.addr %s179, 8
        %s181 = scalar_lea.vmem [#allocation2], %s180
        // Predicated region
        $region33: #{tpu_custom_call.1} parent=31 // pred_check
          %p182 = pneg %p67
        $region34: #{tpu_custom_call.1} parent=31 // pred_check_branch
          %184 = sbr.rel (%p182) target = $region36
        $region35: #{tpu_custom_call.1} parent=31 // pred_region
          %185 = dma.done %s178, 128
        $region36: #{tpu_custom_call.1} parent=31 // pred_fallthru
          _
        %p186 = scmp.lt.s32.totalorder %s20, 1
        %s187 = scalar_select %p186, %s20, 1
        %s188 = smul.addr %s187, 8
        %s189 = scalar_lea.vmem %s0, %s188
        %p190 = pneg %p41
        %p191 = pneg %p38
        %s192 = sand.u32 %s54, 1
        %s193 = scalar_lea.sflag [#allocation3], %s192
        %s194 = sand.u32 %s54, 1
        %s195 = smul.addr %s194, 8
        %s196 = scalar_lea.vmem [#allocation2], %s195
        %p197 = pneg %p67
        %p198 = pneg %p64
        %p199 = scmp.lt.s32.totalorder %s20, 1
        %s200 = scalar_select %p199, %s20, 1
        %s201 = smul.addr %s200, 8
        %s202 = scalar_lea.vmem %s2, %s201
        %p203 = pneg %p93
        %p204 = pneg %p90
        %p205 = pneg %p119
        %p206 = pneg %p116
        %s207 = sand.u32 %s106, 1
        %s208 = scalar_lea.sflag [#allocation4], %s207
        %s209 = sand.u32 %s106, 1
        %s210 = smul.addr %s209, 8
        %s211 = scalar_lea.vmem [#allocation5], %s210
        %p212 = scmp.lt.s32.totalorder %s20, 1
        %s213 = scalar_select %p212, %s20, 1
        %s214 = smul.addr %s213, 8
        %s215 = scalar_lea.vmem %s0, %s214
        %p216 = scmp.lt.s32.totalorder %s20, 1
        %s217 = scalar_select %p216, %s20, 1
        %s218 = smul.addr %s217, 8
        %s219 = scalar_lea.vmem %s2, %s218
        %v220 = vld [vmem:[%s215] sm:$0xff]
        %v221 = vld [vmem:[%s181] sm:$0xff]
        %v222 = vld [vmem:[%s219] sm:$0xff]
        %v223 = vmul.f32 %v220, %v220
        %vm224 = vcmask 523264
        %v225 = vsel %vm224, %v223, 0.0
        %226 = vadd.xlane.f32.xlu0 %v225
        %v227 = vpop.xlane.xlu0 %226
        %v228 = vmax.f32 %v227, 1e-24
        %v229 = vrsqrt.pop %v228
        %v230 = vmul.f32 %v221, %v221
        %v231 = vsel %vm224, %v230, 0.0
        %232 = vadd.xlane.f32.xlu0 %v231
        %v233 = vpop.xlane.xlu0 %232
        %v234 = vmax.f32 %v233, 1e-24
        %v235 = vrsqrt.pop %v234
        %v236 = vmul.f32 %v220, %v229
        %v237 = vmul.f32 %v221, %v235
        %v238 = vsub.f32 %v236, %v237
        %v239 = vadd.f32 %v238, 1e-06
        %v240 = vmul.f32 %v239, %v239
        %v241 = vsel %vm224, %v240, 0.0
        %242 = vadd.xlane.f32.xlu0 %v241
        %v243 = vpop.xlane.xlu0 %242
        %v244 = vrsqrt.pop %v243
        %v245 = vmul.f32 %v243, %v244
        %vm246 = vcmp.eq.f32.partialorder %v243, inf
        %v247 = vsel %vm246, %v243, %v245
        %vm248 = vcmp.eq.f32.partialorder %v243, 0.0
        %v249 = vand.u32 %v243, 2147483648
        %v250 = vsel %vm248, %v249, %v247
        %v251 = vsub.f32 1.0, %v222
        %v252 = vmul.f32 %v251, %v243
        %v253 = vsub.f32 1.0, %v250
        %v254 = vmax.f32 %v253, 0.0
        %v255 = vmul.f32 %v254, %v254
        %v256 = vmul.f32 %v222, %v255
        %v257 = vadd.f32 %v252, %v256
        %vm258 = vcmask 7168
        %v259 = vsel %vm258, %v257, 0.0
        %260 = vadd.xlane.f32.xlu0 %v259
        %v261 = vpop.xlane.xlu0 %260
        %v262 = vrot.slane %v261, 4
        %v263 = vadd.f32 %v261, %v262
        %v264 = vrot.slane %v263, 2
        %v265 = vadd.f32 %v263, %v264
        %v266 = vrot.slane %v265, 1
        %v267 = vadd.f32 %v265, %v266
        %s268 = vtos %v267
        %v269 = vstv %s268
        %270 = vst [vmem:[%s211] sm:$0xff] %v269
        %s271 = sand.u32 %s106, 1
        %s272 = scalar_lea.sflag [#allocation4], %s271
        %s273 = sand.u32 %s106, 1
        %s274 = smul.addr %s273, 8
        %s275 = scalar_lea.vmem [#allocation5], %s274
        // Predicated region
        $region37: #{tpu_custom_call.1} parent=31 // pred_check
          %p276 = pneg %p116
        $region38: #{tpu_custom_call.1} parent=31 // pred_check_branch
          %278 = sbr.rel (%p276) target = $region40
        $region39: #{tpu_custom_call.1} parent=31 // pred_region
          %s280 = ssub.s32 128, 128
          %281 = vsyncadd %s272, %s280
          %s282 = smul.addr %s20, 128
          %s283 = scalar_lea.hbm %s3, %s282
          %s285 = sshll.u32 %s275, 4
          %s286 = int_to_ptr.vmem [resolvable:$true] %s285
          %288 = dma.vmem_to_hbm [thread:$0]  %s286, 128, %s283, %s272
        $region40: #{tpu_custom_call.1} parent=31 // pred_fallthru
          _
      $region32: #{tpu_custom_call.1} parent=5 // pred_fallthru
        _
      %p289 = scmp.le.s32.totalorder 2, %s15
      // Predicated region
      $region41: #{tpu_custom_call.1} parent=5 // pred_check
        %p290 = pneg %p289
      $region42: #{tpu_custom_call.1} parent=5 // pred_check_branch
        %292 = sbr.rel (%p290) target = $region44
      $region43: #{tpu_custom_call.1} parent=5 // pred_region
        %s293 = ssub.s32 %s15, 2
        // Predicated region
        $region45: #{tpu_custom_call.1} parent=43 // pred_check
          %p294 = pneg %p122
        $region46: #{tpu_custom_call.1} parent=43 // pred_check_branch
          %296 = sbr.rel (%p294) target = $region48
        $region47: #{tpu_custom_call.1} parent=43 // pred_region
          %s297 = sand.u32 %s107, 1
          %s298 = scalar_lea.sflag [#allocation4], %s297
          %s299 = sand.u32 %s107, 1
          %s300 = smul.addr %s299, 8
          %s301 = scalar_lea.vmem [#allocation5], %s300
          %302 = dma.done %s298, 128
        $region48: #{tpu_custom_call.1} parent=43 // pred_fallthru
          _
      $region44: #{tpu_custom_call.1} parent=5 // pred_fallthru
        _
    $region6: #{tpu_custom_call.1} parent=1 // loop_footer
      %s19 = sadd.s32 1, %s15
    $region7: #{tpu_custom_call.1} parent=1 // loop_footer_branch
      %14 = sbr.rel target = $region3
    $region8: #{tpu_custom_call.1} parent=1 // loop_exit
      _
    %303 = vsyncpa [#allocation3], 1
    %s304 = scalar_lea.sflag [#allocation3], 1
    %305 = vsyncpa %s304, 1
    %306 = vsyncpa [#allocation4], 1
    %s307 = scalar_lea.sflag [#allocation4], 1
    %308 = vsyncpa %s307, 1

</llo_original>
